<compile_context>
chip_gen: v6e
topology: v6e:2x2x1
jax: 0.10.0
libtpu: 0.0.40
codegen_flags: <defaults>
</compile_context>

<pallas_src>
import jax
import jax.numpy as jnp
from jax.experimental import pallas as pl
from jax.experimental.pallas import tpu as pltpu

_LANES = 1024  # lane-dense slab width (multiple of 128)


def _scale_kernel(w_ref, x_ref, o_ref):
    # w_ref: (1, 1) f32 in SMEM (scalar weight)
    # x_ref / o_ref: f32 tiles in VMEM
    o_ref[...] = x_ref[...] * w_ref[0, 0]


def _round_up(v, m):
    return ((v + m - 1) // m) * m


def _tile_config():
    """(max_tile_rows, vmem_limit_bytes) per TPU generation."""
    kind = jax.devices()[0].device_kind.lower()
    if "v5 lite" in kind or "v5e" in kind or "v5lite" in kind:
        return 512, None                  # 2 MiB tiles fit the 16 MiB default scoped VMEM
    if "v6" in kind:
        return 1024, None                 # 4 MiB tiles; 32 MiB default scoped limit is plenty
    if "v7" in kind:
        return 2048, 40 * 1024 * 1024     # 8 MiB tiles; raise scoped limit (64 MiB physical)
    return 512, None                      # conservative default for other / unknown chips


def _scale_slab(slab, w_smem):
    """slab: (R, _LANES) f32 -> slab * w, via a 1-D parallel row-tile grid."""
    r = slab.shape[0]
    max_tm, vmem_limit = _tile_config()
    if r < 16:
        tm = r  # single block; full-extent dims are exempt from the (8,128) rule
    else:
        # >= 2 grid steps so the "parallel" axis can be split across TCs (v7x),
        # rounded to a multiple of 8 sublanes so a partial boundary tile is legal.
        tm = min(max_tm, _round_up(pl.cdiv(r, 2), 8))
    grid = (pl.cdiv(r, tm),)

    cparams = {"dimension_semantics": ("parallel",)}
    if vmem_limit is not None:
        cparams["vmem_limit_bytes"] = vmem_limit

    n = r * _LANES
    return pl.pallas_call(
        _scale_kernel,
        out_shape=jax.ShapeDtypeStruct((r, _LANES), jnp.float32),
        grid=grid,
        in_specs=[
            pl.BlockSpec(memory_space=pltpu.MemorySpace.SMEM),  # scalar weight
            pl.BlockSpec((tm, _LANES), lambda i: (i, 0)),       # x row tile
        ],
        out_specs=pl.BlockSpec((tm, _LANES), lambda i: (i, 0)),
        compiler_params=pltpu.CompilerParams(**cparams),
        cost_estimate=pl.CostEstimate(
            flops=n, transcendentals=0, bytes_accessed=2 * n * 4),
    )(w_smem, slab)


def _scale_small(x2d, w_smem):
    """x2d: (1, T) f32 with T < _LANES — single full-extent block, no grid."""
    n = x2d.shape[0] * x2d.shape[1]
    return pl.pallas_call(
        _scale_kernel,
        out_shape=jax.ShapeDtypeStruct(x2d.shape, jnp.float32),
        in_specs=[
            pl.BlockSpec(memory_space=pltpu.MemorySpace.SMEM),
            pl.BlockSpec(memory_space=pltpu.MemorySpace.VMEM),
        ],
        out_specs=pl.BlockSpec(memory_space=pltpu.MemorySpace.VMEM),
        cost_estimate=pl.CostEstimate(
            flops=n, transcendentals=0, bytes_accessed=2 * n * 4),
    )(w_smem, x2d)


def sample_fc_forward(x: jax.Array, fc: jax.Array) -> jax.Array:
    """Pallas implementation of `x @ fc` with fc of shape (1,)."""
    assert x.ndim == 2 and x.shape[-1] == 1, x.shape
    assert fc.shape == (1,), fc.shape
    assert x.dtype == jnp.float32, "SampleFC reference math is float32"

    m = x.shape[0]
    w_smem = fc.reshape(1, 1).astype(jnp.float32)
    flat = x.reshape(m)  # metadata-only view of the contiguous (M, 1) input

    main = (m // _LANES) * _LANES
    tail = m - main

    parts = []
    if main:
        main_flat = flat if tail == 0 else flat[:main]
        slab = main_flat.reshape(main // _LANES, _LANES)
        parts.append(_scale_slab(slab, w_smem).reshape(main))
    if tail:
        tail_2d = flat[main:].reshape(1, tail)
        parts.append(_scale_small(tail_2d, w_smem).reshape(tail))

    if len(parts) == 1:
        return parts[0]
    # Only reached for large AND ragged M: one output-assembly pass.
    # TODO(synk): a masked-store / pl.ANY variant could write both pieces into
    # a single (M,) buffer and remove this copy.
    return jnp.concatenate(parts)


if __name__ == "__main__":
    # Deterministic parameter, matching nn.Parameter(torch.tensor([0.4]))
    fc = jnp.array([0.4], dtype=jnp.float32)

    # Small input consistent with the forward: last dim must be 1.
    M = 8
    x = jax.random.normal(jax.random.PRNGKey(0), (M, 1), dtype=jnp.float32)
    y = jax.block_until_ready(sample_fc_forward(x, fc))
    y_ref = x @ fc
    assert y.shape == (M,), y.shape
    assert jnp.allclose(y, y_ref, atol=1e-6, rtol=1e-6)

    # Fast zero-copy slab path (M % 1024 == 0).
    M2 = 2048
    x2 = jax.random.normal(jax.random.PRNGKey(1), (M2, 1), dtype=jnp.float32)
    y2 = jax.block_until_ready(sample_fc_forward(x2, fc))
    assert y2.shape == (M2,)
    assert jnp.allclose(y2, x2 @ fc, atol=1e-6, rtol=1e-6)

    # Multi-step parallel grid with a partial boundary row tile + ragged tail.
    M3 = 17 * 1024 + 100
    x3 = jax.random.normal(jax.random.PRNGKey(2), (M3, 1), dtype=jnp.float32)
    y3 = jax.block_until_ready(sample_fc_forward(x3, fc))
    assert y3.shape == (M3,)
    assert jnp.allclose(y3, x3 @ fc, atol=1e-6, rtol=1e-6)

    print("KERNEL_OK")
</pallas_src>

<mosaic_0001>
module attributes {stable_mosaic.version = 11 : i64} {
  func.func @_scale_kernel(%arg0: memref<1x1xf32, #tpu.memory_space<smem>>, %arg1: memref<1x8xf32, #tpu.memory_space<vmem>>, %arg2: memref<1x8xf32, #tpu.memory_space<vmem>>) attributes {dimension_semantics = [], scalar_prefetch = 0 : i64, scratch_operands = 0 : i64, tpu.core_type = #tpu.core_type<tc>} {
    %c0 = arith.constant 0 : index
    %c0_0 = arith.constant 0 : index
    %0 = vector.load %arg1[%c0, %c0_0] : memref<1x8xf32, #tpu.memory_space<vmem>>, vector<1x8xf32>
    %c0_1 = arith.constant 0 : index
    %c0_2 = arith.constant 0 : index
    %1 = memref.load %arg0[%c0_1, %c0_2] : memref<1x1xf32, #tpu.memory_space<smem>>
    %2 = vector.broadcast %1 : f32 to vector<1x8xf32>
    %3 = arith.mulf %0, %2 : vector<1x8xf32>
    %c0_3 = arith.constant 0 : index
    %c0_4 = arith.constant 0 : index
    %4 = vector.load %arg2[%c0_3, %c0_4] : memref<1x8xf32, #tpu.memory_space<vmem>>, vector<1x8xf32>
    tpu.vector_store %arg2[%c0_3, %c0_4], %3 {strides = array<i32>} : memref<1x8xf32, #tpu.memory_space<vmem>>, vector<1x8xf32>,
    return
  }
}

</mosaic_0001>

<llo_original>
// kernel: tpu_custom_call.1
$region0: #{tpu_custom_call.1}
  #allocation0 [shape = 'u32[]', space=smem, size = 0x4, offset = 0x4, fixed_abs, tag = 'smem constant byte address 0x4 - core index']
  #allocation1 [shape = 'u32[144,128]{1,0:T(1,128)}', space=vmem, size = 0x12000, scoped, tag = 'internal scratch']
  #allocation2 [shape = 'f32[1,1]{1,0:T(1,128)S(6)}', space=smem, size = 0x200, scoped, tag = 'scoped memory for tpu_custom_call.1']
  %s0 = inlined_call_operand.<no memory space> [shape: f32[1,1], index: 0, kind: input, shape index: {}]
  %s1 = inlined_call_operand.vmem [shape: f32[1,8], index: 1, kind: input, shape index: {}]
  %s2 = inlined_call_operand.hbm [shape: f32[1,8], index: 2, kind: output, shape index: {}]
  %s3 = sld [smem:[#allocation0]]
  $region18: #{tpu_custom_call.1} parent=0
    _
  %s5 = ssub.s32 1, %s3
  %s6 = scalar_select 0, %s5, %s3
  %7 = sst [smem:[#allocation2]] %s0
  $region1: #{tpu_custom_call.1} parent=0
    #allocation3 [shape = 'u8[512]{0}', space=vmem, size = 0x400, scoped, tag = 'output window, operand 0, single buffered']
    #allocation4 [shape = 's32[1]{0}', space=sflag, size = 0x4, scoped, tag = 'scoped memory for tpu_custom_call.1']
    %8 = vsyncpa [#allocation4], 0
    // Predicated region
    $region2: #{tpu_custom_call.1} parent=1 // pred_check
      _
    $region3: #{tpu_custom_call.1} parent=1 // pred_check_branch
      %10 = sbr.rel (0) target = $region5
    $region4: #{tpu_custom_call.1} parent=1 // pred_region
      _
    $region5: #{tpu_custom_call.1} parent=1 // pred_fallthru
      _
    // Predicated region
    $region6: #{tpu_custom_call.1} parent=1 // pred_check
      _
    $region7: #{tpu_custom_call.1} parent=1 // pred_check_branch
      %12 = sbr.rel (0) target = $region9
    $region8: #{tpu_custom_call.1} parent=1 // pred_region
      _
    $region9: #{tpu_custom_call.1} parent=1 // pred_fallthru
      _
    %v13 = vld [vmem:[%s1] sm:$0x1]
    %s14 = sld [smem:[#allocation2]]
    %v15 = vstv %s14
    %v16 = vmul.f32 %v13, %v15
    %vm17 = vcmask 57344
    %18 = vst.msk [vmem:[#allocation3] sm:$0x1] %vm17, %v16
    // Predicated region
    $region10: #{tpu_custom_call.1} parent=1 // pred_check
      _
    $region11: #{tpu_custom_call.1} parent=1 // pred_check_branch
      %20 = sbr.rel (0) target = $region13
    $region12: #{tpu_custom_call.1} parent=1 // pred_region
      %s22 = ssub.s32 16, 16
      %23 = vsyncadd [#allocation4], %s22
      %s25 = sshll.u32 [#allocation3], 4
      %s26 = int_to_ptr.vmem [resolvable:$true] %s25
      %28 = dma.vmem_to_hbm [thread:$0]  %s26, 16, %s2, [#allocation4]
    $region13: #{tpu_custom_call.1} parent=1 // pred_fallthru
      _
    // Predicated region
    $region14: #{tpu_custom_call.1} parent=1 // pred_check
      _
    $region15: #{tpu_custom_call.1} parent=1 // pred_check_branch
      %30 = sbr.rel (0) target = $region17
    $region16: #{tpu_custom_call.1} parent=1 // pred_region
      %31 = dma.done [#allocation4], 16
    $region17: #{tpu_custom_call.1} parent=1 // pred_fallthru
      _
    %32 = vsyncpa [#allocation4], 1

</llo_original>
